<compile_context>
chip_gen: v7x
topology: tpu7x:2x2x1
jax: 0.10.0
libtpu: 0.0.40
codegen_flags: <defaults>
</compile_context>

<pallas_src>
import jax
import jax.numpy as jnp
from jax.experimental import pallas as pl
from jax.experimental.pallas import tpu as pltpu


def _round_up(x, m):
    return (x + m - 1) // m * m


def _layer_rows(d_h1, d_h2, d_out):
    """Sublane-aligned (multiple-of-8) row offsets for the packed param tile."""
    r1 = 0
    r2 = _round_up(r1 + d_h1, 8)          # 8
    r3 = _round_up(r2 + d_h2, 8)          # 24
    rows = _round_up(r3 + d_out, 8)       # 32
    return r1, r2, r3, rows


def pack_params(w1, b1, w2, b2, w3, b3):
    """Pack all weights (PyTorch (out, in) layout) and biases into ONE small
    f32 tile.  Layer l starts at sublane-aligned row r_l; columns [0, in_l)
    hold W_l and column in_l holds b_l."""
    d_in, d_h1 = w1.shape[1], w1.shape[0]
    d_h2, d_out = w2.shape[0], w3.shape[0]
    r1, r2, r3, rows = _layer_rows(d_h1, d_h2, d_out)
    cols = max(d_in, d_h1, d_h2) + 1                  # widest fan-in + bias col
    p = jnp.zeros((rows, cols), jnp.float32)
    for r, (w, b) in zip((r1, r2, r3), ((w1, b1), (w2, b2), (w3, b3))):
        o, i = w.shape
        p = p.at[r:r + o, 0:i].set(w.astype(jnp.float32))
        p = p.at[r:r + o, i].set(b.astype(jnp.float32))
    return p


def _make_mlp_kernel(d_in, d_h1, d_h2, d_out):
    r1, r2, r3, _ = _layer_rows(d_h1, d_h2, d_out)

    def kernel(x_ref, p_ref, o_ref):
        # x: (d_in, TB), batch on lanes; accumulate in f32 (bf16 x supported).
        x = x_ref[...].astype(jnp.float32)

        p = p_ref[...]                                  # resident packed params
        w1 = p[r1:r1 + d_h1, 0:d_in]                    # (8, 4)
        b1 = p[r1:r1 + d_h1, d_in:d_in + 1]             # (8, 1)
        w2 = p[r2:r2 + d_h2, 0:d_h1]                    # (9, 8)
        b2 = p[r2:r2 + d_h2, d_h1:d_h1 + 1]             # (9, 1)
        w3 = p[r3:r3 + d_out, 0:d_h2]                   # (3, 9)
        b3 = p[r3:r3 + d_out, d_h2:d_h2 + 1]            # (3, 1)

        # fc1 + ReLU  -> (8, TB)
        h1 = jnp.maximum(jnp.dot(w1, x, preferred_element_type=jnp.float32) + b1, 0.0)
        # fc2 + ReLU  -> (9, TB)
        h2 = jnp.maximum(jnp.dot(w2, h1, preferred_element_type=jnp.float32) + b2, 0.0)
        # out         -> (3, TB)
        y = jnp.dot(w3, h2, preferred_element_type=jnp.float32) + b3
        o_ref[...] = y.astype(o_ref.dtype)

    return kernel


def _pick_tile(B, tile_b):
    """Lane tile: multiple of 128, large (amortize ~0.35us/step overhead) but
    capped so batches bigger than one tile give >= 2 grid steps (v7x has 2
    TensorCores; the 'parallel' axis only shards with multiple steps)."""
    two_steps = _round_up(max(1, -(-B // 2)), 128)
    return max(128, min(int(tile_b), two_steps))


def mlp_forward_feature_major(x_t, w1, b1, w2, b2, w3, b3, *,
                              tile_b=32768, out_dtype=None):
    """Fast path (review option (b)): x_t is (in_features, B) with batch on
    the last axis.  Returns (out_features, B).  No wrapper HBM passes."""
    d_in, B = x_t.shape
    d_h1, d_h2, d_out = w1.shape[0], w2.shape[0], w3.shape[0]
    out_dtype = x_t.dtype if out_dtype is None else out_dtype

    TB = _pick_tile(B, tile_b)
    grid = (pl.cdiv(B, TB),)

    p = pack_params(w1, b1, w2, b2, w3, b3)
    kernel = _make_mlp_kernel(d_in, d_h1, d_h2, d_out)

    # Advisory cost model: pure streaming, tiny matmuls.
    flops = 2 * B * (d_in * d_h1 + d_h1 * d_h2 + d_h2 * d_out)
    bytes_accessed = (x_t.size * x_t.dtype.itemsize
                      + p.size * p.dtype.itemsize
                      + d_out * B * jnp.dtype(out_dtype).itemsize)
    cost = pl.CostEstimate(flops=flops, transcendentals=0,
                           bytes_accessed=bytes_accessed)

    # Scoped-VMEM budget from the tile: double-buffered in/out blocks
    # (sublane-padded to 8 rows) + ~48 rows worth of f32 intermediates, with
    # 2x margin.  Never below the 32 MiB default, never above 48 MiB (safe on
    # v7x's 64 MiB physical VMEM).
    per_lane = 4 * (2 * 8 + 2 * 8 + 48)
    vmem_limit = int(min(48 * 1024 * 1024,
                         max(32 * 1024 * 1024, 2 * per_lane * TB)))

    y_t = pl.pallas_call(
        kernel,
        out_shape=jax.ShapeDtypeStruct((d_out, B), out_dtype),
        grid=grid,
        in_specs=[
            pl.BlockSpec((d_in, TB), lambda i: (0, i)),   # streamed batch tile
            pl.BlockSpec(p.shape, lambda i: (0, 0)),      # resident packed params
        ],
        out_specs=pl.BlockSpec((d_out, TB), lambda i: (0, i)),
        compiler_params=pltpu.CompilerParams(
            dimension_semantics=("parallel",),
            vmem_limit_bytes=vmem_limit),
        cost_estimate=cost,
    )(x_t, p)
    return y_t


def mlp_forward(x, w1, b1, w2, b2, w3, b3, *, tile_b=32768):
    """PyTorch-layout wrapper.  x: (B, in_features); weights in (out, in)
    layout, biases (out,).  Returns (B, out_features), dtype follows x.

    The batch axis must live on lanes inside the kernel, so this wrapper does
    ONE fused transpose+pad on the input and one transpose on the output.
    Producers/consumers already holding the (features, B) layout should call
    mlp_forward_feature_major directly and skip both copies."""
    B, d_in = x.shape
    d_out = w3.shape[0]

    TB = _pick_tile(B, tile_b)
    B_pad = _round_up(B, TB)

    # Single fused XLA copy: transpose + zero-pad to a full tile multiple
    # (exact tiling => every kernel store is a full-width unmasked vst).
    x_t = jnp.pad(x.T, ((0, 0), (0, B_pad - B)))        # (d_in, B_pad)

    y_t = mlp_forward_feature_major(x_t, w1, b1, w2, b2, w3, b3,
                                    tile_b=TB, out_dtype=x.dtype)

    # Padded columns carry the bias/ReLU chain of zero inputs (garbage w.r.t.
    # real data) -- they MUST be sliced off before use.
    return y_t[:, :B].T                                  # (B, d_out)


def init_params(key, in_features=4, h1=8, h2=9, out_features=3):
    """Deterministic init mimicking PyTorch nn.Linear defaults
    (uniform(-1/sqrt(fan_in), 1/sqrt(fan_in))), stored in PyTorch layout."""
    ks = jax.random.split(key, 6)

    def lin(kw, kb, fan_in, fan_out):
        bound = 1.0 / jnp.sqrt(jnp.float32(fan_in))
        w = jax.random.uniform(kw, (fan_out, fan_in), jnp.float32, -bound, bound)
        b = jax.random.uniform(kb, (fan_out,), jnp.float32, -bound, bound)
        return w, b

    w1, b1 = lin(ks[0], ks[1], in_features, h1)
    w2, b2 = lin(ks[2], ks[3], h1, h2)
    w3, b3 = lin(ks[4], ks[5], h2, out_features)
    return w1, b1, w2, b2, w3, b3


def reference_forward(x, w1, b1, w2, b2, w3, b3):
    h1 = jnp.maximum(x @ w1.T + b1, 0.0)
    h2 = jnp.maximum(h1 @ w2.T + b2, 0.0)
    return h2 @ w3.T + b3


if __name__ == "__main__":
    key = jax.random.PRNGKey(0)
    kx, kp = jax.random.split(key)

    params = init_params(kp)

    # Small batch: single grid step, batch padded to one 128-lane tile.
    B, in_features = 8, 4
    x = jax.random.normal(kx, (B, in_features), jnp.float32)
    out = mlp_forward(x, *params)
    jax.block_until_ready(out)
    ref = reference_forward(x, *params)
    assert out.shape == (B, 3)
    assert jnp.allclose(out, ref, atol=1e-5, rtol=1e-5)

    # Padding + a multi-step pipelined grid (explicit small tile -> 3 steps).
    B2 = 300
    x2 = jax.random.normal(kx, (B2, in_features), jnp.float32)
    out2 = mlp_forward(x2, *params, tile_b=128)
    jax.block_until_ready(out2)
    ref2 = reference_forward(x2, *params)
    assert out2.shape == (B2, 3)
    assert jnp.allclose(out2, ref2, atol=1e-5, rtol=1e-5)

    # Default tile policy: mid-size batch -> tile capped so the parallel grid
    # has >= 2 steps (megacore path on v7x).
    B3 = 1000
    x3 = jax.random.normal(kx, (B3, in_features), jnp.float32)
    out3 = mlp_forward(x3, *params)
    jax.block_until_ready(out3)
    ref3 = reference_forward(x3, *params)
    assert out3.shape == (B3, 3)
    assert jnp.allclose(out3, ref3, atol=1e-5, rtol=1e-5)

    print("KERNEL_OK")
</pallas_src>

<mosaic_0001>
module attributes {stable_mosaic.version = 11 : i64} {
  func.func @kernel(%arg0: i32, %arg1: memref<4x128xf32, #tpu.memory_space<vmem>>, %arg2: memref<32x10xf32, #tpu.memory_space<vmem>>, %arg3: memref<3x128xf32, #tpu.memory_space<vmem>>) attributes {dimension_semantics = [#tpu.dimension_semantics<parallel>], iteration_bounds = array<i64: 1>, scalar_prefetch = 0 : i64, scratch_operands = 0 : i64, tpu.core_type = #tpu.core_type<tc>, window_params = [{transform_indices = @transform_0, window_bounds = array<i64: 4, 128>}, {pipeline_mode = #tpu.pipeline_mode<synchronous>, transform_indices = @transform_1, window_bounds = array<i64: 32, 10>}, {transform_indices = @transform_2, window_bounds = array<i64: 3, 128>}]} {
    %c0 = arith.constant 0 : index
    %c0_0 = arith.constant 0 : index
    %0 = vector.load %arg1[%c0, %c0_0] : memref<4x128xf32, #tpu.memory_space<vmem>>, vector<4x128xf32>
    %c0_1 = arith.constant 0 : index
    %c0_2 = arith.constant 0 : index
    %1 = vector.load %arg2[%c0_1, %c0_2] : memref<32x10xf32, #tpu.memory_space<vmem>>, vector<32x10xf32>
    %2 = vector.extract_strided_slice %1 {offsets = [0, 0], sizes = [8, 4], strides = [1, 1]} : vector<32x10xf32> to vector<8x4xf32>
    %3 = vector.extract_strided_slice %1 {offsets = [0, 4], sizes = [8, 1], strides = [1, 1]} : vector<32x10xf32> to vector<8x1xf32>
    %4 = vector.extract_strided_slice %1 {offsets = [8, 0], sizes = [9, 8], strides = [1, 1]} : vector<32x10xf32> to vector<9x8xf32>
    %5 = vector.extract_strided_slice %1 {offsets = [8, 8], sizes = [9, 1], strides = [1, 1]} : vector<32x10xf32> to vector<9x1xf32>
    %6 = vector.extract_strided_slice %1 {offsets = [24, 0], sizes = [3, 9], strides = [1, 1]} : vector<32x10xf32> to vector<3x9xf32>
    %7 = vector.extract_strided_slice %1 {offsets = [24, 9], sizes = [3, 1], strides = [1, 1]} : vector<32x10xf32> to vector<3x1xf32>
    %cst = arith.constant dense<0.000000e+00> : vector<8x128xf32>
    %8 = tpu.matmul %2, %0, %cst {dimension_numbers = #tpu.dot_dimension_numbers<[1], [0], [0], [1], [0, 0, 1, 1], [], []>} : vector<8x4xf32>, vector<4x128xf32>, vector<8x128xf32> -> vector<8x128xf32>
    %9 = vector.broadcast %3 : vector<8x1xf32> to vector<8x128xf32>
    %10 = arith.addf %8, %9 : vector<8x128xf32>
    %cst_3 = arith.constant 0.000000e+00 : f32
    %11 = vector.broadcast %cst_3 : f32 to vector<8x128xf32>
    %12 = arith.maximumf %10, %11 : vector<8x128xf32>
    %cst_4 = arith.constant dense<0.000000e+00> : vector<9x128xf32>
    %13 = tpu.matmul %4, %12, %cst_4 {dimension_numbers = #tpu.dot_dimension_numbers<[1], [0], [0], [1], [0, 0, 1, 1], [], []>} : vector<9x8xf32>, vector<8x128xf32>, vector<9x128xf32> -> vector<9x128xf32>
    %14 = vector.broadcast %5 : vector<9x1xf32> to vector<9x128xf32>
    %15 = arith.addf %13, %14 : vector<9x128xf32>
    %cst_5 = arith.constant 0.000000e+00 : f32
    %16 = vector.broadcast %cst_5 : f32 to vector<9x128xf32>
    %17 = arith.maximumf %15, %16 : vector<9x128xf32>
    %cst_6 = arith.constant dense<0.000000e+00> : vector<3x128xf32>
    %18 = tpu.matmul %6, %17, %cst_6 {dimension_numbers = #tpu.dot_dimension_numbers<[1], [0], [0], [1], [0, 0, 1, 1], [], []>} : vector<3x9xf32>, vector<9x128xf32>, vector<3x128xf32> -> vector<3x128xf32>
    %19 = vector.broadcast %7 : vector<3x1xf32> to vector<3x128xf32>
    %20 = arith.addf %18, %19 : vector<3x128xf32>
    %c0_7 = arith.constant 0 : index
    %c0_8 = arith.constant 0 : index
    %21 = vector.load %arg3[%c0_7, %c0_8] : memref<3x128xf32, #tpu.memory_space<vmem>>, vector<3x128xf32>
    tpu.vector_store %arg3[%c0_7, %c0_8], %20 {strides = array<i32>} : memref<3x128xf32, #tpu.memory_space<vmem>>, vector<3x128xf32>,
    return
  }
  func.func @transform_0(%arg0: i32) -> (i32, i32) {
    %c0_i32 = arith.constant 0 : i32
    %c0_i32_0 = arith.constant 0 : i32
    return %c0_i32, %arg0 : i32, i32
  }
  func.func @transform_1(%arg0: i32) -> (i32, i32) {
    %c0_i32 = arith.constant 0 : i32
    %c0_i32_0 = arith.constant 0 : i32
    %c0_i32_1 = arith.constant 0 : i32
    return %c0_i32, %c0_i32_0 : i32, i32
  }
  func.func @transform_2(%arg0: i32) -> (i32, i32) {
    %c0_i32 = arith.constant 0 : i32
    %c0_i32_0 = arith.constant 0 : i32
    return %c0_i32, %arg0 : i32, i32
  }
}

</mosaic_0001>

<llo_original>
// kernel: tpu_custom_call.1
$region0: #{tpu_custom_call.1}
  #allocation0 [shape = 'u32[]', space=smem, size = 0x4, offset = 0x4, fixed_abs, tag = 'smem constant byte address 0x4 - core index']
  #allocation1 [shape = 'u32[144,128]{1,0:T(1,128)}', space=vmem, size = 0x12000, scoped, tag = 'internal scratch']
  %s0 = inlined_call_operand.vmem [shape: f32[4,128], index: 0, kind: input, shape index: {}]
  %s1 = inlined_call_operand.vmem [shape: f32[32,10], index: 1, kind: input, shape index: {}]
  %s2 = inlined_call_operand.hbm [shape: f32[3,128], index: 2, kind: output, shape index: {}]
  %s3 = sld [smem:[#allocation0]]
  $region18: #{tpu_custom_call.1} parent=0
    _
  %s5 = ssub.s32 1, %s3
  %s6 = scalar_select 0, %s5, %s3
  $region1: #{tpu_custom_call.1} parent=0
    #allocation2 [shape = 'u8[2048]{0}', space=vmem, size = 0x800, scoped, tag = 'output window, operand 0, single buffered']
    #allocation3 [shape = 's32[1]{0}', space=sflag, size = 0x4, scoped, tag = 'scoped memory for tpu_custom_call.1']
    %7 = vsyncpa [#allocation3], 0
    // Predicated region
    $region2: #{tpu_custom_call.1} parent=1 // pred_check
      _
    $region3: #{tpu_custom_call.1} parent=1 // pred_check_branch
      %9 = sbr.rel (0) target = $region5
    $region4: #{tpu_custom_call.1} parent=1 // pred_region
      _
    $region5: #{tpu_custom_call.1} parent=1 // pred_fallthru
      _
    // Predicated region
    $region6: #{tpu_custom_call.1} parent=1 // pred_check
      _
    $region7: #{tpu_custom_call.1} parent=1 // pred_check_branch
      %11 = sbr.rel (0) target = $region9
    $region8: #{tpu_custom_call.1} parent=1 // pred_region
      _
    $region9: #{tpu_custom_call.1} parent=1 // pred_fallthru
      _
    %v12 = vld [vmem:[%s0] sm:$0xf]
    %v13 = vld [vmem:[%s1] sm:$0xff]
    %v14 = vld [vmem:[%s1 + $0x8] sm:$0xff]
    %v15 = vld [vmem:[%s1 + $0x10] sm:$0xff]
    %v16 = vld [vmem:[%s1 + $0x18] sm:$0xff]
    %18 = vset.pattern.permute.xlu0 4
    %19 = vperm.xlu0 %18, %v13
    %v20 = vpop.permute.xlu0 %19
    %vm22 = vcmask 31744
    %v23 = vsel %vm22, %v13, 0
    %vm25 = vcmask 1043456
    %v27 = vsel %vm25, %v12, 0
    %29 = vmatprep.subr.mxu0 0.0
    %30 = vmatpush1.msra.mxu0 %v27
    %31 = vmatprep.subr.mxu0 0.0
    %32 = vmatpush1.msra.mxu0 0.0
    %33 = vmatprep.subr.mxu0 0.0
    %34 = vmatpush1.msra.mxu0 0.0
    %35 = vmatprep.subr.mxu0 0.0
    %36 = vmatpush1.msra.mxu0 0.0
    %37 = vmatprep.subr.mxu0 0.0
    %38 = vmatpush1.msra.mxu0 0.0
    %39 = vmatprep.subr.mxu0 0.0
    %40 = vmatpush1.msra.mxu0 0.0
    %41 = vmatprep.subr.mxu0 0.0
    %42 = vmatpush1.msra.mxu0 0.0
    %43 = vmatprep.subr.mxu0 0.0
    %44 = vmatpush1.msra.mxu0 0.0
    %45 = vmatprep.subr.mxu0 0.0
    %46 = vmatpush1.msra.mxu0 0.0
    %47 = vmatprep.subr.mxu0 0.0
    %48 = vmatpush1.msra.mxu0 0.0
    %49 = vmatprep.subr.mxu0 0.0
    %50 = vmatpush1.msra.mxu0 0.0
    %51 = vmatprep.subr.mxu0 0.0
    %52 = vmatpush1.msra.mxu0 0.0
    %53 = vmatprep.subr.mxu0 0.0
    %54 = vmatpush1.msra.mxu0 0.0
    %55 = vmatprep.subr.mxu0 0.0
    %56 = vmatpush1.msra.mxu0 0.0
    %57 = vmatprep.subr.mxu0 0.0
    %58 = vmatpush1.msra.mxu0 0.0
    %59 = vmatprep.subr.mxu0 0.0
    %60 = vmatpush1.msra.mxu0 0.0
    %61 = vmatprep.subr.mxu0 0.0
    %62 = vmatpush1.msra.mxu0 0.0
    %63 = vmatprep.subr.mxu0 0.0
    %64 = vmatpush1.msra.mxu0 0.0
    %65 = vmatprep.subr.mxu0 0.0
    %66 = vmatpush1.msra.mxu0 0.0
    %67 = vmatprep.subr.mxu0 0.0
    %68 = vmatpush1.msra.mxu0 0.0
    %69 = vmatprep.subr.mxu0 0.0
    %70 = vmatpush1.msra.mxu0 0.0
    %71 = vmatprep.subr.mxu0 0.0
    %72 = vmatpush1.msra.mxu0 0.0
    %73 = vmatprep.subr.mxu0 0.0
    %74 = vmatpush1.msra.mxu0 0.0
    %75 = vmatprep.subr.mxu0 0.0
    %76 = vmatpush1.msra.mxu0 0.0
    %77 = vmatprep.subr.mxu0 0.0
    %78 = vmatpush1.msra.mxu0 0.0
    %79 = vmatprep.subr.mxu0 0.0
    %80 = vmatpush1.msra.mxu0 0.0
    %81 = vmatprep.subr.mxu0 0.0
    %82 = vmatpush1.msra.mxu0 0.0
    %83 = vmatprep.subr.mxu0 0.0
    %84 = vmatpush1.msra.mxu0 0.0
    %85 = vmatprep.subr.mxu0 0.0
    %86 = vmatpush1.msra.mxu0 0.0
    %87 = vmatprep.subr.mxu0 0.0
    %88 = vmatpush1.msra.mxu0 0.0
    %89 = vmatprep.subr.mxu0 0.0
    %90 = vmatpush1.msra.mxu0 0.0
    %91 = vmatprep.subr.mxu0 0.0
    %92 = vmatpush1.msra.mxu0 0.0
    %93 = vmatprep.mubr.f32.mxu0 0.0
    %94 = vmatmul.mubr.f32.gmra.mrb[0].mxu0 %v23
    %v95 = vpop.f32.mrb[0].mxu0
    %v96 = vadd.f32 %v20, %v95
    %v97 = vpop.f32.mrb[0].mxu0
    %98 = vdwg.mxu0
    %v99 = vmax.f32 %v96, 0.0
    %101 = vset.pattern.permute.xlu0 8
    %102 = vperm.xlu0 %101, %v14
    %v103 = vpop.permute.xlu0 %102
    %106 = vset.pattern.permute.xlu0 8
    %107 = vperm.xlu0 %106, %v15
    %v108 = vpop.permute.xlu0 %107
    %vm110 = vcmask 64512
    %v111 = vsel %vm110, %v14, 0
    %v113 = vsel %vm110, %v15, 0
    %115 = vmatprep.subr.mxu0 0.0
    %116 = vmatpush1.msra.mxu0 %v99
    %117 = vmatprep.subr.mxu0 0.0
    %118 = vmatpush1.msra.mxu0 0.0
    %119 = vmatprep.subr.mxu0 0.0
    %120 = vmatpush1.msra.mxu0 0.0
    %121 = vmatprep.subr.mxu0 0.0
    %122 = vmatpush1.msra.mxu0 0.0
    %123 = vmatprep.subr.mxu0 0.0
    %124 = vmatpush1.msra.mxu0 0.0
    %125 = vmatprep.subr.mxu0 0.0
    %126 = vmatpush1.msra.mxu0 0.0
    %127 = vmatprep.subr.mxu0 0.0
    %128 = vmatpush1.msra.mxu0 0.0
    %129 = vmatprep.subr.mxu0 0.0
    %130 = vmatpush1.msra.mxu0 0.0
    %131 = vmatprep.subr.mxu0 0.0
    %132 = vmatpush1.msra.mxu0 0.0
    %133 = vmatprep.subr.mxu0 0.0
    %134 = vmatpush1.msra.mxu0 0.0
    %135 = vmatprep.subr.mxu0 0.0
    %136 = vmatpush1.msra.mxu0 0.0
    %137 = vmatprep.subr.mxu0 0.0
    %138 = vmatpush1.msra.mxu0 0.0
    %139 = vmatprep.subr.mxu0 0.0
    %140 = vmatpush1.msra.mxu0 0.0
    %141 = vmatprep.subr.mxu0 0.0
    %142 = vmatpush1.msra.mxu0 0.0
    %143 = vmatprep.subr.mxu0 0.0
    %144 = vmatpush1.msra.mxu0 0.0
    %145 = vmatprep.subr.mxu0 0.0
    %146 = vmatpush1.msra.mxu0 0.0
    %147 = vmatprep.subr.mxu0 0.0
    %148 = vmatpush1.msra.mxu0 0.0
    %149 = vmatprep.subr.mxu0 0.0
    %150 = vmatpush1.msra.mxu0 0.0
    %151 = vmatprep.subr.mxu0 0.0
    %152 = vmatpush1.msra.mxu0 0.0
    %153 = vmatprep.subr.mxu0 0.0
    %154 = vmatpush1.msra.mxu0 0.0
    %155 = vmatprep.subr.mxu0 0.0
    %156 = vmatpush1.msra.mxu0 0.0
    %157 = vmatprep.subr.mxu0 0.0
    %158 = vmatpush1.msra.mxu0 0.0
    %159 = vmatprep.subr.mxu0 0.0
    %160 = vmatpush1.msra.mxu0 0.0
    %161 = vmatprep.subr.mxu0 0.0
    %162 = vmatpush1.msra.mxu0 0.0
    %163 = vmatprep.subr.mxu0 0.0
    %164 = vmatpush1.msra.mxu0 0.0
    %165 = vmatprep.subr.mxu0 0.0
    %166 = vmatpush1.msra.mxu0 0.0
    %167 = vmatprep.subr.mxu0 0.0
    %168 = vmatpush1.msra.mxu0 0.0
    %169 = vmatprep.subr.mxu0 0.0
    %170 = vmatpush1.msra.mxu0 0.0
    %171 = vmatprep.subr.mxu0 0.0
    %172 = vmatpush1.msra.mxu0 0.0
    %173 = vmatprep.subr.mxu0 0.0
    %174 = vmatpush1.msra.mxu0 0.0
    %175 = vmatprep.subr.mxu0 0.0
    %176 = vmatpush1.msra.mxu0 0.0
    %177 = vmatprep.subr.mxu0 0.0
    %178 = vmatpush1.msra.mxu0 0.0
    %179 = vmatprep.mubr.f32.mxu0 0.0
    %180 = vmatmul.mubr.f32.gmra.mrb[0].mxu0 %v111
    %v181 = vpop.f32.mrb[0].mxu0
    %v182 = vadd.f32 %v103, %v181
    %v183 = vpop.f32.mrb[0].mxu0
    %184 = vmatprep.mubr.f32.mxu0 0.0
    %185 = vmatmul.mubr.f32.gmra.mrb[0].mxu0 %v113
    %v186 = vpop.f32.mrb[0].mxu0
    %v187 = vadd.f32 %v108, %v186
    %v188 = vpop.f32.mrb[0].mxu0
    %189 = vdwg.mxu0
    %v190 = vmax.f32 %v182, 0.0
    %v191 = vmax.f32 %v187, 0.0
    %193 = vset.pattern.permute.xlu0 9
    %194 = vperm.xlu0 %193, %v16
    %v195 = vpop.permute.xlu0 %194
    %vm197 = vcmask 72704
    %v198 = vsel %vm197, %v16, 0
    %vm200 = vcmask 1040384
    %v202 = vsel %vm200, %v191, 0
    %204 = vmatprep.subr.mxu0 0.0
    %205 = vmatpush1.msra.mxu0 %v190
    %206 = vmatprep.subr.mxu0 0.0
    %207 = vmatpush1.msra.mxu0 %v202
    %208 = vmatprep.subr.mxu0 0.0
    %209 = vmatpush1.msra.mxu0 0.0
    %210 = vmatprep.subr.mxu0 0.0
    %211 = vmatpush1.msra.mxu0 0.0
    %212 = vmatprep.subr.mxu0 0.0
    %213 = vmatpush1.msra.mxu0 0.0
    %214 = vmatprep.subr.mxu0 0.0
    %215 = vmatpush1.msra.mxu0 0.0
    %216 = vmatprep.subr.mxu0 0.0
    %217 = vmatpush1.msra.mxu0 0.0
    %218 = vmatprep.subr.mxu0 0.0
    %219 = vmatpush1.msra.mxu0 0.0
    %220 = vmatprep.subr.mxu0 0.0
    %221 = vmatpush1.msra.mxu0 0.0
    %222 = vmatprep.subr.mxu0 0.0
    %223 = vmatpush1.msra.mxu0 0.0
    %224 = vmatprep.subr.mxu0 0.0
    %225 = vmatpush1.msra.mxu0 0.0
    %226 = vmatprep.subr.mxu0 0.0
    %227 = vmatpush1.msra.mxu0 0.0
    %228 = vmatprep.subr.mxu0 0.0
    %229 = vmatpush1.msra.mxu0 0.0
    %230 = vmatprep.subr.mxu0 0.0
    %231 = vmatpush1.msra.mxu0 0.0
    %232 = vmatprep.subr.mxu0 0.0
    %233 = vmatpush1.msra.mxu0 0.0
    %234 = vmatprep.subr.mxu0 0.0
    %235 = vmatpush1.msra.mxu0 0.0
    %236 = vmatprep.subr.mxu0 0.0
    %237 = vmatpush1.msra.mxu0 0.0
    %238 = vmatprep.subr.mxu0 0.0
    %239 = vmatpush1.msra.mxu0 0.0
    %240 = vmatprep.subr.mxu0 0.0
    %241 = vmatpush1.msra.mxu0 0.0
    %242 = vmatprep.subr.mxu0 0.0
    %243 = vmatpush1.msra.mxu0 0.0
    %244 = vmatprep.subr.mxu0 0.0
    %245 = vmatpush1.msra.mxu0 0.0
    %246 = vmatprep.subr.mxu0 0.0
    %247 = vmatpush1.msra.mxu0 0.0
    %248 = vmatprep.subr.mxu0 0.0
    %249 = vmatpush1.msra.mxu0 0.0
    %250 = vmatprep.subr.mxu0 0.0
    %251 = vmatpush1.msra.mxu0 0.0
    %252 = vmatprep.subr.mxu0 0.0
    %253 = vmatpush1.msra.mxu0 0.0
    %254 = vmatprep.subr.mxu0 0.0
    %255 = vmatpush1.msra.mxu0 0.0
    %256 = vmatprep.subr.mxu0 0.0
    %257 = vmatpush1.msra.mxu0 0.0
    %258 = vmatprep.subr.mxu0 0.0
    %259 = vmatpush1.msra.mxu0 0.0
    %260 = vmatprep.subr.mxu0 0.0
    %261 = vmatpush1.msra.mxu0 0.0
    %262 = vmatprep.subr.mxu0 0.0
    %263 = vmatpush1.msra.mxu0 0.0
    %264 = vmatprep.subr.mxu0 0.0
    %265 = vmatpush1.msra.mxu0 0.0
    %266 = vmatprep.subr.mxu0 0.0
    %267 = vmatpush1.msra.mxu0 0.0
    %268 = vmatprep.mubr.f32.mxu0 0.0
    %269 = vmatmul.mubr.f32.gmra.mrb[0].mxu0 %v198
    %v270 = vpop.f32.mrb[0].mxu0
    %v271 = vadd.f32 %v195, %v270
    %v272 = vpop.f32.mrb[0].mxu0
    %273 = vdwg.mxu0
    %274 = vst [vmem:[#allocation2] sm:$0x7] %v271
    // Predicated region
    $region10: #{tpu_custom_call.1} parent=1 // pred_check
      _
    $region11: #{tpu_custom_call.1} parent=1 // pred_check_branch
      %276 = sbr.rel (0) target = $region13
    $region12: #{tpu_custom_call.1} parent=1 // pred_region
      %s278 = ssub.s32 64, 64
      %279 = vsyncadd [#allocation3], %s278
      %s281 = sshll.u32 [#allocation2], 4
      %s282 = int_to_ptr.vmem [resolvable:$true] %s281
      %284 = dma.vmem_to_hbm [thread:$0]  %s282, 64, %s2, [#allocation3]
    $region13: #{tpu_custom_call.1} parent=1 // pred_fallthru
      _
    // Predicated region
    $region14: #{tpu_custom_call.1} parent=1 // pred_check
      _
    $region15: #{tpu_custom_call.1} parent=1 // pred_check_branch
      %286 = sbr.rel (0) target = $region17
    $region16: #{tpu_custom_call.1} parent=1 // pred_region
      %287 = dma.done [#allocation3], 64
    $region17: #{tpu_custom_call.1} parent=1 // pred_fallthru
      _
    %288 = vsyncpa [#allocation3], 1

</llo_original>
